<compile_context>
chip_gen: v5e
topology: v5e:2x2
jax: 0.10.0
libtpu: 0.0.40
codegen_flags: <defaults>
</compile_context>

<pallas_src>
import functools

import jax
import jax.numpy as jnp
from jax import lax
from jax.experimental import pallas as pl
from jax.experimental.pallas import tpu as pltpu


_MAX_BLOCK_ROWS = 32768


def _round_up(x, m):
    return ((x + m - 1) // m) * m


def _derive_budgets():
    """Per-generation tile / VMEM budgets (conservative v7x fallback)."""
    vmem = 64 * 1024 * 1024                      # v7x per-TC VMEM (smallest)
    try:
        info = pltpu.get_tpu_info()
        vmem = int(getattr(info, "vmem_capacity_bytes", vmem)) or vmem
    except Exception:
        pass
    # ~4 MiB/input tile on 64 MiB VMEM (v7x), ~8 MiB on 128 MiB (v5e/v6e).
    tile = int(min(8 * 1024 * 1024, max(2 * 1024 * 1024, vmem // 16)))
    limit = int(min(int(vmem * 0.75), 96 * 1024 * 1024))
    # Below this per-batch slab size the manual-DMA path's per-step overhead
    # dominates; fall back to slice + flat path.
    min_lagged = 1024 * 1024 if vmem <= 64 * 1024 * 1024 else 512 * 1024
    return tile, limit, min_lagged


_TARGET_BLOCK_BYTES, _VMEM_LIMIT_BYTES, _MIN_LAGGED_BLOCK_BYTES = _derive_budgets()


def _preferred_block_rows(d, itemsize, tile_bytes):
    """Rows per tile: ~tile_bytes per (f32-promoted) input, multiple of 8."""
    eff = max(4, itemsize)                       # compute/accumulate in f32
    r = tile_bytes // max(1, d * eff)
    return max(8, min(_MAX_BLOCK_ROWS, (r // 8) * 8))


def _reduce_to_8(x, rows, d):
    # (rows, d) -> (8, d): whole-vreg VPU adds, no cross-sublane XLU reduce.
    return jnp.sum(x.reshape(rows // 8, 8, d), axis=0)


# --------------------------------------------------------------------------- #
# Path 1: flat, auto-pipelined, per-block (8, D) partial sums ("parallel").
# --------------------------------------------------------------------------- #
def _flat_partial_sums(out2d, tgt2d, *, tile_bytes, vmem_limit):
    n_rows, d = out2d.shape
    itemsize = max(out2d.dtype.itemsize, tgt2d.dtype.itemsize)
    preferred = _preferred_block_rows(d, itemsize, tile_bytes)
    # Balance blocks so the last one isn't nearly all padding.
    n_blocks = pl.cdiv(n_rows, preferred)
    rows = min(preferred, _round_up(pl.cdiv(n_rows, n_blocks), 8))
    n_blocks = pl.cdiv(n_rows, rows)
    has_tail = (n_rows % rows) != 0
    tail_valid = n_rows - (n_blocks - 1) * rows          # static

    def kernel(o_ref, t_ref, p_ref):
        diff = o_ref[...].astype(jnp.float32) - t_ref[...].astype(jnp.float32)
        sq = diff * diff

        if not has_tail:
            p_ref[...] = _reduce_to_8(sq, rows, d)
        else:
            is_last = pl.program_id(0) == n_blocks - 1

            @pl.when(jnp.logical_not(is_last))
            def _():
                p_ref[...] = _reduce_to_8(sq, rows, d)

            @pl.when(is_last)
            def _():
                rid = lax.broadcasted_iota(jnp.int32, sq.shape, 0)
                p_ref[...] = _reduce_to_8(
                    jnp.where(rid < tail_valid, sq, 0.0), rows, d)

    return pl.pallas_call(
        kernel,
        out_shape=jax.ShapeDtypeStruct((n_blocks * 8, d), jnp.float32),
        grid=(n_blocks,),
        in_specs=[pl.BlockSpec((rows, d), lambda i: (i, 0)),
                  pl.BlockSpec((rows, d), lambda i: (i, 0))],
        out_specs=pl.BlockSpec((8, d), lambda i: (i, 0)),
        compiler_params=pltpu.CompilerParams(
            dimension_semantics=("parallel",),
            vmem_limit_bytes=vmem_limit,
        ),
    )(out2d, tgt2d)


# --------------------------------------------------------------------------- #
# Path 2: lag > 0, manual double-buffered DMA from the un-sliced target,
# 2-way parallel split of the step range (both v7x TensorCores stream HBM).
# --------------------------------------------------------------------------- #
def _lagged_partial_sums(out2d, tgt2d, B, T_out, T_tgt, lag, D,
                         *, tile_bytes, vmem_limit):
    itemsize = max(out2d.dtype.itemsize, tgt2d.dtype.itemsize)
    rows = min(_preferred_block_rows(D, itemsize, tile_bytes),
               (T_out // 8) * 8)                 # caller guarantees T_out >= 8
    n_t = pl.cdiv(T_out, rows)                   # row-tiles per batch
    n_steps = B * n_t
    has_tail = (T_out % rows) != 0

    # Leading parallel axis so both v7x TCs run half the steps each; harmless
    # (two serial slabs) on 1-TC chips.
    n_par = 2 if n_steps >= 2 else 1
    steps_per_par = pl.cdiv(n_steps, n_par)

    def kernel(o_hbm, t_hbm, acc_ref, obuf, tbuf, sems):
        p = pl.program_id(0)
        s = pl.program_id(1)
        step0 = p * steps_per_par
        step = step0 + s
        slot = lax.rem(s, 2)

        def copies(st, sl):
            b = st // n_t
            t = st - b * n_t
            t0 = jnp.minimum(t * rows, T_out - rows)   # clamp fully in-bounds
            co = pltpu.make_async_copy(o_hbm.at[pl.ds(b * T_out + t0, rows)],
                                       obuf.at[sl], sems.at[0, sl])
            ct = pltpu.make_async_copy(t_hbm.at[pl.ds(b * T_tgt + lag + t0, rows)],
                                       tbuf.at[sl], sems.at[1, sl])
            return co, ct

        def fetch(st, sl):
            co, ct = copies(st, sl)
            co.start()
            ct.start()

        @pl.when(s == 0)
        def _():
            acc_ref[...] = jnp.zeros_like(acc_ref)
            fetch(step0, 0)                      # step0 < n_steps by construction

        # Prefetch the next step of this slab into the other slot.
        @pl.when(jnp.logical_and(s + 1 < steps_per_par, step + 1 < n_steps))
        def _():
            fetch(step + 1, 1 - slot)

        @pl.when(step < n_steps)
        def _():
            # Wait on the exact descriptors that were started for this step.
            co, ct = copies(step, slot)
            co.wait()
            ct.wait()

            diff = obuf[slot].astype(jnp.float32) - tbuf[slot].astype(jnp.float32)
            sq = diff * diff
            if has_tail:
                # Rows duplicated by the clamp (last tile of each batch) were
                # already counted by the previous tile — zero them out.
                t = lax.rem(step, n_t)
                dup = jnp.maximum(t * rows - (T_out - rows), 0)
                rid = lax.broadcasted_iota(jnp.int32, sq.shape, 0)
                sq = jnp.where(rid >= dup, sq, 0.0)
            acc_ref[...] += _reduce_to_8(sq, rows, D)

    return pl.pallas_call(
        kernel,
        out_shape=jax.ShapeDtypeStruct((n_par * 8, D), jnp.float32),
        grid_spec=pltpu.PrefetchScalarGridSpec(
            num_scalar_prefetch=0,
            grid=(n_par, steps_per_par),
            in_specs=[pl.BlockSpec(memory_space=pl.ANY),
                      pl.BlockSpec(memory_space=pl.ANY)],
            out_specs=pl.BlockSpec((8, D), lambda p, s: (p, 0)),
            scratch_shapes=[
                pltpu.VMEM((2, rows, D), out2d.dtype),
                pltpu.VMEM((2, rows, D), tgt2d.dtype),
                pltpu.SemaphoreType.DMA((2, 2)),
            ],
        ),
        compiler_params=pltpu.CompilerParams(
            dimension_semantics=("parallel", "arbitrary"),
            vmem_limit_bytes=vmem_limit,
        ),
    )(out2d, tgt2d)


# --------------------------------------------------------------------------- #
# Public wrapper (MSE3D.forward).
# --------------------------------------------------------------------------- #
def mse3d(output, target, *,
          min_lagged_block_bytes=None, block_bytes=None):
    """Pallas implementation of MSE3D.forward(output, target)."""
    assert output.ndim == 3 and target.ndim == 3, "expected (B, T, D) inputs"
    B, T_out, D = output.shape
    B_t, T_tgt, D_t = target.shape
    assert B == B_t and D == D_t and T_tgt >= T_out

    if min_lagged_block_bytes is None:
        min_lagged_block_bytes = _MIN_LAGGED_BLOCK_BYTES
    tile_bytes = _TARGET_BLOCK_BYTES if block_bytes is None else block_bytes

    lag = T_tgt - T_out
    inv_count = 1.0 / float(B * T_out * D)
    itemsize = max(output.dtype.itemsize, target.dtype.itemsize)

    out2d = output.reshape(B * T_out, D)          # free reshape (contiguous)

    use_lagged = (lag > 0 and T_out >= 8
                  and (T_out * D * itemsize) >= min_lagged_block_bytes)
    if use_lagged:
        tgt2d = target.reshape(B * T_tgt, D)      # full target, no slice copy
        partial = _lagged_partial_sums(
            out2d, tgt2d, B, T_out, T_tgt, lag, D,
            tile_bytes=tile_bytes, vmem_limit=_VMEM_LIMIT_BYTES)
    else:
        # TODO(synk): for lag > 0 this materializes target[:, lag:, :]; this
        # branch is only taken when the per-batch slab is too small for the
        # manual-DMA path to pay off.
        tgt = target if lag == 0 else target[:, lag:, :]
        tgt2d = tgt.reshape(B * T_out, D)
        partial = _flat_partial_sums(
            out2d, tgt2d, tile_bytes=tile_bytes, vmem_limit=_VMEM_LIMIT_BYTES)

    return (jnp.sum(partial) * inv_count).astype(output.dtype)


if __name__ == "__main__":
    key = jax.random.PRNGKey(0)
    k1, k2, k3, k4 = jax.random.split(key, 4)

    # --- Small case: B=2, T_out=8, T_tgt=12 (lag=4), D=128 -------------------
    B, T_out, T_tgt, D = 2, 8, 12, 128
    output = jax.random.normal(k1, (B, T_out, D), dtype=jnp.float32)
    target = jax.random.normal(k2, (B, T_tgt, D), dtype=jnp.float32)
    lag = T_tgt - T_out
    ref = jnp.mean((output - target[:, lag:, :]) ** 2)

    loss_flat = jax.jit(mse3d)(output, target)                     # flat path
    loss_lag = jax.jit(functools.partial(mse3d, min_lagged_block_bytes=0)
                       )(output, target)                           # forced lagged
    target0 = target[:, lag:, :]
    ref0 = jnp.mean((output - target0) ** 2)
    loss0 = jax.jit(mse3d)(output, target0)                        # lag == 0

    # --- Bigger case with non-divisible tails, small forced tiles ------------
    B2, T2_out, T2_tgt = 2, 200, 210                               # lag = 10
    out_b = jax.random.normal(k3, (B2, T2_out, D), dtype=jnp.float32)
    tgt_b = jax.random.normal(k4, (B2, T2_tgt, D), dtype=jnp.float32)
    ref_b = jnp.mean((out_b - tgt_b[:, T2_tgt - T2_out:, :]) ** 2)

    loss_b_flat = jax.jit(
        functools.partial(mse3d, block_bytes=64 * 1024,
                          min_lagged_block_bytes=1 << 30))(out_b, tgt_b)
    loss_b_lag = jax.jit(
        functools.partial(mse3d, block_bytes=64 * 1024,
                          min_lagged_block_bytes=0))(out_b, tgt_b)

    jax.block_until_ready((loss_flat, loss_lag, loss0, loss_b_flat, loss_b_lag))

    assert jnp.allclose(loss_flat, ref, rtol=1e-5, atol=1e-6), (loss_flat, ref)
    assert jnp.allclose(loss_lag, ref, rtol=1e-5, atol=1e-6), (loss_lag, ref)
    assert jnp.allclose(loss0, ref0, rtol=1e-5, atol=1e-6), (loss0, ref0)
    assert jnp.allclose(loss_b_flat, ref_b, rtol=1e-5, atol=1e-6), (loss_b_flat, ref_b)
    assert jnp.allclose(loss_b_lag, ref_b, rtol=1e-5, atol=1e-6), (loss_b_lag, ref_b)

    print("KERNEL_OK")
</pallas_src>

<mosaic_0001>
module attributes {stable_mosaic.version = 11 : i64} {
  func.func @kernel(%arg0: i32, %arg1: memref<16x128xf32, #tpu.memory_space<vmem>>, %arg2: memref<16x128xf32, #tpu.memory_space<vmem>>, %arg3: memref<8x128xf32, #tpu.memory_space<vmem>>) attributes {dimension_semantics = [#tpu.dimension_semantics<parallel>], iteration_bounds = array<i64: 1>, scalar_prefetch = 0 : i64, scratch_operands = 0 : i64, tpu.core_type = #tpu.core_type<tc>, window_params = [{transform_indices = @transform_0, window_bounds = array<i64: 16, 128>}, {transform_indices = @transform_1, window_bounds = array<i64: 16, 128>}, {transform_indices = @transform_2, window_bounds = array<i64: 8, 128>}]} {
    %c0 = arith.constant 0 : index
    %c0_0 = arith.constant 0 : index
    %0 = vector.load %arg1[%c0, %c0_0] : memref<16x128xf32, #tpu.memory_space<vmem>>, vector<16x128xf32>
    %c0_1 = arith.constant 0 : index
    %c0_2 = arith.constant 0 : index
    %1 = vector.load %arg2[%c0_1, %c0_2] : memref<16x128xf32, #tpu.memory_space<vmem>>, vector<16x128xf32>
    %2 = arith.subf %0, %1 : vector<16x128xf32>
    %3 = arith.mulf %2, %2 : vector<16x128xf32>
    %4 = vector.shape_cast %3 : vector<16x128xf32> to vector<2x8x128xf32>
    %cst = arith.constant dense<0.000000e+00> : vector<8x128xf32>
    %5 = vector.multi_reduction <add>, %4, %cst [0] : vector<2x8x128xf32> to vector<8x128xf32>
    %c0_3 = arith.constant 0 : index
    %c0_4 = arith.constant 0 : index
    %6 = vector.load %arg3[%c0_3, %c0_4] : memref<8x128xf32, #tpu.memory_space<vmem>>, vector<8x128xf32>
    tpu.vector_store %arg3[%c0_3, %c0_4], %5 {strides = array<i32>} : memref<8x128xf32, #tpu.memory_space<vmem>>, vector<8x128xf32>,
    return
  }
  func.func @transform_0(%arg0: i32) -> (i32, i32) {
    %c0_i32 = arith.constant 0 : i32
    %c0_i32_0 = arith.constant 0 : i32
    return %arg0, %c0_i32 : i32, i32
  }
  func.func @transform_1(%arg0: i32) -> (i32, i32) {
    %c0_i32 = arith.constant 0 : i32
    %c0_i32_0 = arith.constant 0 : i32
    return %arg0, %c0_i32 : i32, i32
  }
  func.func @transform_2(%arg0: i32) -> (i32, i32) {
    %c0_i32 = arith.constant 0 : i32
    %c0_i32_0 = arith.constant 0 : i32
    return %arg0, %c0_i32 : i32, i32
  }
}

</mosaic_0001>

<llo_original>
// kernel: mse3d.1
$region0: #{mse3d.1}
  #allocation0 [shape = 'u32[]', space=smem, size = 0x4, offset = 0x4, fixed_abs, tag = 'smem constant byte address 0x4 - core index']
  #allocation1 [shape = 'u32[72,128]{1,0:T(1,128)}', space=vmem, size = 0x9000, scoped, tag = 'internal scratch']
  %s0 = inlined_call_operand.vmem [shape: f32[16,128], index: 0, kind: input, shape index: {}]
  %s1 = inlined_call_operand.vmem [shape: f32[16,128], index: 1, kind: input, shape index: {}]
  %s2 = inlined_call_operand.vmem [shape: f32[8,128], index: 2, kind: output, shape index: {}]
  %s3 = sld [smem:[#allocation0]]
  $region18: #{mse3d.1} parent=0
    _
  %s5 = ssub.s32 1, %s3
  %s6 = scalar_select 0, %s5, %s3
  // Predicated region
  $region2: #{mse3d.1} parent=0 // pred_check
    _
  $region3: #{mse3d.1} parent=0 // pred_check_branch
    %8 = sbr.rel (0) target = $region5
  $region4: #{mse3d.1} parent=0 // pred_region
    _
  $region5: #{mse3d.1} parent=0 // pred_fallthru
    _
  // Predicated region
  $region6: #{mse3d.1} parent=0 // pred_check
    _
  $region7: #{mse3d.1} parent=0 // pred_check_branch
    %10 = sbr.rel (0) target = $region9
  $region8: #{mse3d.1} parent=0 // pred_region
    _
  $region9: #{mse3d.1} parent=0 // pred_fallthru
    _
  %v11 = vld [vmem:[%s0] sm:$0xff]
  %v12 = vld [vmem:[%s0 + $0x8] sm:$0xff]
  %v13 = vld [vmem:[%s1] sm:$0xff]
  %v14 = vld [vmem:[%s1 + $0x8] sm:$0xff]
  %v15 = vsub.f32 %v11, %v13
  %v16 = vsub.f32 %v12, %v14
  %v17 = vmul.f32 %v15, %v15
  %v18 = vmul.f32 %v16, %v16
  %v19 = vadd.f32 %v17, %v18
  %20 = vst [vmem:[%s2] sm:$0xff] %v19
  // Predicated region
  $region10: #{mse3d.1} parent=0 // pred_check
    _
  $region11: #{mse3d.1} parent=0 // pred_check_branch
    %22 = sbr.rel (0) target = $region13
  $region12: #{mse3d.1} parent=0 // pred_region
    _
  $region13: #{mse3d.1} parent=0 // pred_fallthru
    _
  // Predicated region
  $region14: #{mse3d.1} parent=0 // pred_check
    _
  $region15: #{mse3d.1} parent=0 // pred_check_branch
    %24 = sbr.rel (0) target = $region17
  $region16: #{mse3d.1} parent=0 // pred_region
    _
  $region17: #{mse3d.1} parent=0 // pred_fallthru
    _

</llo_original>
